<compile_context>
chip_gen: v5e
topology: v5e:2x2
jax: 0.10.0
libtpu: 0.0.40
codegen_flags: <defaults>
</compile_context>

<pallas_src>
import functools

import jax
import jax.numpy as jnp
from jax.experimental import pallas as pl
from jax.experimental.pallas import tpu as pltpu

_LANE = 128


def _round_up(x, m):
    return (x + m - 1) // m * m


def _vmem_capacity_bytes():
    """Generation-aware VMEM capacity (falls back to the v7x 64 MiB floor)."""
    try:
        cap = getattr(pltpu.get_tpu_info(), "vmem_capacity_bytes", None)
        if cap:
            return int(cap)
    except Exception:
        pass
    return 64 * 2**20


# --------------------------------------------------------------------------
# Shared gate: MLP -> ReLU -> MLP -> DWConv(1x1) on a stacked (C, 2) RHS.
# --------------------------------------------------------------------------
def _gate(avg, mx, w1, b1, w2, b2, dw_w, dw_b, pw_w, pw_b, alpha, beta):
    """Returns per-channel scales (s1, s2), each (C, 1).

    Column 0 of the stacked RHS is the avg pool, column 1 the max pool, so the
    shared branch runs once for both pools.  The '+1' folds in the residual
    Y = X*comb + X.
    """
    C = avg.shape[0]
    col = jax.lax.broadcasted_iota(jnp.int32, (C, 2), 1)
    v = jnp.where(col == 0, avg, mx)                                    # (C, 2)
    h = jnp.dot(w1, v, preferred_element_type=jnp.float32) + b1         # (C//2, 2)
    h = jnp.maximum(h, 0.0)
    o = jnp.dot(w2, h, preferred_element_type=jnp.float32) + b2         # (C, 2)
    d = o * dw_w + dw_b                                                 # depthwise k=1
    g = jnp.dot(pw_w, d, preferred_element_type=jnp.float32) + pw_b     # pointwise 1x1
    g_avg = g[:, 0:1]
    g_max = g[:, 1:2]
    s1 = 1.0 + alpha * g_avg + beta * g_max
    s2 = 1.0 + alpha * g_max + beta * g_avg
    return s1, s2


# --------------------------------------------------------------------------
# Fused single-pass kernel: stats + gate + apply per batch element.
# --------------------------------------------------------------------------
def _fused_kernel(inv_hw,
                  x1_ref, x2_ref,
                  w1_ref, b1_ref, w2_ref, b2_ref,
                  dw_w_ref, dw_b_ref, pw_w_ref, pw_b_ref,
                  alpha_ref, beta_ref,
                  y1_ref, y2_ref):
    x1 = x1_ref[0]                                   # (C, HW) full slab
    x2 = x2_ref[0]
    diff = jnp.abs(x1 - x2)
    avg = jnp.sum(diff, axis=-1, keepdims=True) * inv_hw
    mx = jnp.max(diff, axis=-1, keepdims=True)
    s1, s2 = _gate(avg, mx,
                   w1_ref[...], b1_ref[...], w2_ref[...], b2_ref[...],
                   dw_w_ref[...], dw_b_ref[...], pw_w_ref[...], pw_b_ref[...],
                   alpha_ref[...], beta_ref[...])
    y1_ref[0] = x1 * s1
    y2_ref[0] = x2 * s2


# --------------------------------------------------------------------------
# Two-pass fallback, pass 1: pooled stats of |x1-x2| + gate -> (B, C, 1) scales.
# --------------------------------------------------------------------------
def _stats_gate_kernel(inv_hw, hw, tile_hw, ragged,
                       x1_ref, x2_ref,
                       w1_ref, b1_ref, w2_ref, b2_ref,
                       dw_w_ref, dw_b_ref, pw_w_ref, pw_b_ref,
                       alpha_ref, beta_ref,
                       s1_ref, s2_ref,
                       sum_acc, max_acc):
    t = pl.program_id(1)

    diff = jnp.abs(x1_ref[0] - x2_ref[0])            # (C, tile_hw), diff >= 0
    if ragged:
        # Last block is only partially valid (reads past HW are garbage).
        # Zero those lanes: safe for both pools since diff >= 0 and the avg
        # divides by the true H*W.  Cheap VPU work, hidden under DMA.
        rem = hw - t * tile_hw
        lane = jax.lax.broadcasted_iota(jnp.int32, diff.shape, 1)
        diff = jnp.where(lane < rem, diff, 0.0)

    @pl.when(t == 0)
    def _():
        sum_acc[...] = jnp.zeros_like(sum_acc)
        max_acc[...] = jnp.zeros_like(max_acc)       # 0 (not -inf) OK: diff >= 0

    sum_acc[...] += jnp.sum(diff, axis=-1, keepdims=True)               # (C, 1)
    max_acc[...] = jnp.maximum(max_acc[...],
                               jnp.max(diff, axis=-1, keepdims=True))   # (C, 1)

    @pl.when(t == pl.num_programs(1) - 1)
    def _():
        avg = sum_acc[...] * inv_hw                  # divide by TRUE H*W
        s1, s2 = _gate(avg, max_acc[...],
                       w1_ref[...], b1_ref[...], w2_ref[...], b2_ref[...],
                       dw_w_ref[...], dw_b_ref[...], pw_w_ref[...], pw_b_ref[...],
                       alpha_ref[...], beta_ref[...])
        s1_ref[0] = s1
        s2_ref[0] = s2


# --------------------------------------------------------------------------
# Two-pass fallback, pass 2: elementwise gating, fully parallel.
# --------------------------------------------------------------------------
def _apply_kernel(x1_ref, x2_ref, s1_ref, s2_ref, y1_ref, y2_ref):
    y1_ref[0] = x1_ref[0] * s1_ref[0]                # (C, tile_hw) * (C, 1)
    y2_ref[0] = x2_ref[0] * s2_ref[0]


# --------------------------------------------------------------------------
# Wrapper
# --------------------------------------------------------------------------
def dfem_forward(x1, x2, params, *, force_two_pass=False,
                 stats_tile=None, apply_tile=None):
    """x1, x2: (B, C, H, W) float32. Returns (Y1, Y2) with the same shape."""
    B, C, H, W = x1.shape
    HW = H * W

    # No wrapper-side padding/slicing: kernels run on the unpadded arrays.
    x1f = x1.reshape(B, C, HW)
    x2f = x2.reshape(B, C, HW)

    param_order = ("w1", "b1", "w2", "b2", "dw_w", "dw_b", "pw_w", "pw_b",
                   "alpha", "beta")
    param_args = [params[k] for k in param_order]
    param_bytes = sum(int(p.size) * 4 for p in param_args)

    vmem_cap = _vmem_capacity_bytes()

    def const_spec(shape, n_grid):
        nd = len(shape)
        if n_grid == 1:
            return pl.BlockSpec(shape, lambda b, _nd=nd: (0,) * _nd)
        return pl.BlockSpec(shape, lambda b, t, _nd=nd: (0,) * _nd)

    # ---- fused single-pass path: 4 HBM transits instead of 6 ---------------
    slab = C * HW * 4
    # x1/x2/y1/y2 slabs double-buffered (8) plus elementwise temporaries.
    fused_need = 12 * slab + 2 * param_bytes + (4 << 20)
    use_fused = (not force_two_pass) and fused_need <= int(0.85 * vmem_cap)

    if use_fused:
        x_spec = pl.BlockSpec((1, C, HW), lambda b: (b, 0, 0))
        vmem_limit = int(min(vmem_cap, max(32 << 20, fused_need)))
        y1f, y2f = pl.pallas_call(
            functools.partial(_fused_kernel, 1.0 / HW),
            out_shape=(jax.ShapeDtypeStruct((B, C, HW), jnp.float32),
                       jax.ShapeDtypeStruct((B, C, HW), jnp.float32)),
            grid_spec=pltpu.PrefetchScalarGridSpec(
                num_scalar_prefetch=0,
                grid=(B,),
                in_specs=[x_spec, x_spec]
                         + [const_spec(p.shape, 1) for p in param_args],
                out_specs=(x_spec, x_spec)),
            compiler_params=pltpu.CompilerParams(
                dimension_semantics=("parallel",),
                vmem_limit_bytes=vmem_limit),
        )(x1f, x2f, *param_args)
        return y1f.reshape(B, C, H, W), y2f.reshape(B, C, H, W)

    # ---- two-pass fallback --------------------------------------------------
    def pick_tile(budget_bytes):
        t = (budget_bytes // (C * 4)) // _LANE * _LANE
        t = max(_LANE, t)
        return min(t, _round_up(HW, _LANE))

    # Pass 1 has only 4 big live blocks (x1, x2 double-buffered) -> 2x tile of
    # pass 2 (8 live blocks: x1, x2, y1, y2 double-buffered).
    tile1 = stats_tile if stats_tile is not None else pick_tile(vmem_cap // 8)
    tile1 = min(max(_LANE, _round_up(int(tile1), _LANE)), _round_up(HW, _LANE))
    tile2 = apply_tile if apply_tile is not None else pick_tile(vmem_cap // 16)
    tile2 = min(max(_LANE, _round_up(int(tile2), _LANE)), _round_up(HW, _LANE))

    num_t1 = pl.cdiv(HW, tile1)
    num_t2 = pl.cdiv(HW, tile2)
    ragged1 = (HW % tile1) != 0

    s_spec = pl.BlockSpec((1, C, 1), lambda b, t: (b, 0, 0))

    # Pass 1: pooled stats + gate -> per-(b, c) scales (B, C, 1).
    x_spec1 = pl.BlockSpec((1, C, tile1), lambda b, t: (b, 0, t))
    blk1 = C * tile1 * 4
    vmem1 = int(min(vmem_cap,
                    max(32 << 20, 4 * blk1 + 2 * param_bytes + (8 << 20))))
    s1, s2 = pl.pallas_call(
        functools.partial(_stats_gate_kernel, 1.0 / HW, HW, tile1, ragged1),
        out_shape=(jax.ShapeDtypeStruct((B, C, 1), jnp.float32),
                   jax.ShapeDtypeStruct((B, C, 1), jnp.float32)),
        grid_spec=pltpu.PrefetchScalarGridSpec(
            num_scalar_prefetch=0,
            grid=(B, num_t1),
            in_specs=[x_spec1, x_spec1]
                     + [const_spec(p.shape, 2) for p in param_args],
            out_specs=(s_spec, s_spec),
            scratch_shapes=[pltpu.VMEM((C, 1), jnp.float32),
                            pltpu.VMEM((C, 1), jnp.float32)]),
        compiler_params=pltpu.CompilerParams(
            dimension_semantics=("parallel", "arbitrary"),
            vmem_limit_bytes=vmem1),
    )(x1f, x2f, *param_args)

    # Pass 2: apply the gate; lane-dense tiles, partial last block handled by
    # Pallas (out-of-bounds writes dropped).
    x_spec2 = pl.BlockSpec((1, C, tile2), lambda b, t: (b, 0, t))
    blk2 = C * tile2 * 4
    vmem2 = int(min(vmem_cap, max(32 << 20, 8 * blk2 + (8 << 20))))
    y1f, y2f = pl.pallas_call(
        _apply_kernel,
        out_shape=(jax.ShapeDtypeStruct((B, C, HW), jnp.float32),
                   jax.ShapeDtypeStruct((B, C, HW), jnp.float32)),
        grid_spec=pltpu.PrefetchScalarGridSpec(
            num_scalar_prefetch=0,
            grid=(B, num_t2),
            in_specs=[x_spec2, x_spec2, s_spec, s_spec],
            out_specs=(x_spec2, x_spec2)),
        compiler_params=pltpu.CompilerParams(
            dimension_semantics=("parallel", "parallel"),
            vmem_limit_bytes=vmem2),
    )(x1f, x2f, s1, s2)

    return y1f.reshape(B, C, H, W), y2f.reshape(B, C, H, W)


# --------------------------------------------------------------------------
# Pure-JAX reference mirroring the PyTorch forward.
# --------------------------------------------------------------------------
def dfem_reference(x1, x2, p):
    diff = jnp.abs(x1 - x2)
    avg = diff.mean(axis=(2, 3))                     # (B, C)
    mx = diff.max(axis=(2, 3))                       # (B, C)

    def branch(v):
        h = jax.nn.relu(v @ p["w1"].T + p["b1"][:, 0])
        o = h @ p["w2"].T + p["b2"][:, 0]
        d = o * p["dw_w"][:, 0] + p["dw_b"][:, 0]
        return d @ p["pw_w"].T + p["pw_b"][:, 0]     # (B, C)

    g_avg = branch(avg)
    g_max = branch(mx)
    a = p["alpha"][:, 0]
    b = p["beta"][:, 0]
    c1 = (a * g_avg + b * g_max)[:, :, None, None]
    c2 = (a * g_max + b * g_avg)[:, :, None, None]
    return x1 * c1 + x1, x2 * c2 + x2


def init_params(key, C):
    ks = jax.random.split(key, 8)
    s = 0.1
    return {
        "w1":    s * jax.random.normal(ks[0], (C // 2, C), jnp.float32),
        "b1":    s * jax.random.normal(ks[1], (C // 2, 1), jnp.float32),
        "w2":    s * jax.random.normal(ks[2], (C, C // 2), jnp.float32),
        "b2":    s * jax.random.normal(ks[3], (C, 1), jnp.float32),
        "dw_w":  s * jax.random.normal(ks[4], (C, 1), jnp.float32),
        "dw_b":  s * jax.random.normal(ks[5], (C, 1), jnp.float32),
        "pw_w":  s * jax.random.normal(ks[6], (C, C), jnp.float32),
        "pw_b":  s * jax.random.normal(ks[7], (C, 1), jnp.float32),
        "alpha": jnp.ones((C, 1), jnp.float32),   # nn.Parameter(torch.ones(1,C,1,1))
        "beta":  jnp.ones((C, 1), jnp.float32),
    }


if __name__ == "__main__":
    key = jax.random.PRNGKey(0)

    def run_case(B, C, H, W, **kw):
        seed = B * 1000003 + C * 1009 + H * 131 + W
        k1, k2, kp = jax.random.split(jax.random.fold_in(key, seed), 3)
        x1 = jax.random.normal(k1, (B, C, H, W), jnp.float32)
        x2 = jax.random.normal(k2, (B, C, H, W), jnp.float32)
        params = init_params(kp, C)

        y1, y2 = dfem_forward(x1, x2, params, **kw)
        jax.block_until_ready((y1, y2))

        r1, r2 = dfem_reference(x1, x2, params)
        assert jnp.allclose(y1, r1, rtol=1e-3, atol=1e-3), f"Y1 mismatch {(B, C, H, W)}"
        assert jnp.allclose(y2, r2, rtol=1e-3, atol=1e-3), f"Y2 mismatch {(B, C, H, W)}"

    # Fused single-pass path, 128-aligned HW (HW = 256).
    run_case(2, 8, 16, 16)
    # Fused path, unaligned HW = 100 (full-dim blocks, no padding anywhere).
    run_case(2, 8, 10, 10)
    # Forced two-pass path: multi-tile sum/max accumulation + tiled apply.
    run_case(2, 8, 32, 32, force_two_pass=True, stats_tile=256, apply_tile=128)
    # Forced two-pass path with a ragged last tile (HW = 143): exercises the
    # in-kernel tail mask and the partial-block apply writes.
    run_case(2, 8, 11, 13, force_two_pass=True, stats_tile=128, apply_tile=128)

    print("KERNEL_OK")
</pallas_src>

<mosaic_0001>
module attributes {stable_mosaic.version = 11 : i64} {
  func.func @_fused_kernel(%arg0: i32, %arg1: memref<1x8x256xf32, #tpu.memory_space<vmem>>, %arg2: memref<1x8x256xf32, #tpu.memory_space<vmem>>, %arg3: memref<4x8xf32, #tpu.memory_space<vmem>>, %arg4: memref<4x1xf32, #tpu.memory_space<vmem>>, %arg5: memref<8x4xf32, #tpu.memory_space<vmem>>, %arg6: memref<8x1xf32, #tpu.memory_space<vmem>>, %arg7: memref<8x1xf32, #tpu.memory_space<vmem>>, %arg8: memref<8x1xf32, #tpu.memory_space<vmem>>, %arg9: memref<8x8xf32, #tpu.memory_space<vmem>>, %arg10: memref<8x1xf32, #tpu.memory_space<vmem>>, %arg11: memref<8x1xf32, #tpu.memory_space<vmem>>, %arg12: memref<8x1xf32, #tpu.memory_space<vmem>>, %arg13: memref<1x8x256xf32, #tpu.memory_space<vmem>>, %arg14: memref<1x8x256xf32, #tpu.memory_space<vmem>>) attributes {dimension_semantics = [#tpu.dimension_semantics<parallel>], iteration_bounds = array<i64: 2>, scalar_prefetch = 0 : i64, scratch_operands = 0 : i64, tpu.core_type = #tpu.core_type<tc>, window_params = [{transform_indices = @transform_0, window_bounds = array<i64: 1, 8, 256>}, {transform_indices = @transform_1, window_bounds = array<i64: 1, 8, 256>}, {pipeline_mode = #tpu.pipeline_mode<synchronous>, transform_indices = @transform_2, window_bounds = array<i64: 4, 8>}, {pipeline_mode = #tpu.pipeline_mode<synchronous>, transform_indices = @transform_3, window_bounds = array<i64: 4, 1>}, {pipeline_mode = #tpu.pipeline_mode<synchronous>, transform_indices = @transform_4, window_bounds = array<i64: 8, 4>}, {pipeline_mode = #tpu.pipeline_mode<synchronous>, transform_indices = @transform_5, window_bounds = array<i64: 8, 1>}, {pipeline_mode = #tpu.pipeline_mode<synchronous>, transform_indices = @transform_6, window_bounds = array<i64: 8, 1>}, {pipeline_mode = #tpu.pipeline_mode<synchronous>, transform_indices = @transform_7, window_bounds = array<i64: 8, 1>}, {pipeline_mode = #tpu.pipeline_mode<synchronous>, transform_indices = @transform_8, window_bounds = array<i64: 8, 8>}, {pipeline_mode = #tpu.pipeline_mode<synchronous>, transform_indices = @transform_9, window_bounds = array<i64: 8, 1>}, {pipeline_mode = #tpu.pipeline_mode<synchronous>, transform_indices = @transform_10, window_bounds = array<i64: 8, 1>}, {pipeline_mode = #tpu.pipeline_mode<synchronous>, transform_indices = @transform_11, window_bounds = array<i64: 8, 1>}, {transform_indices = @transform_12, window_bounds = array<i64: 1, 8, 256>}, {transform_indices = @transform_13, window_bounds = array<i64: 1, 8, 256>}]} {
    %c0 = arith.constant 0 : index
    %c0_0 = arith.constant 0 : index
    %c0_1 = arith.constant 0 : index
    %0 = vector.load %arg1[%c0, %c0_0, %c0_1] : memref<1x8x256xf32, #tpu.memory_space<vmem>>, vector<1x8x256xf32>
    %1 = vector.shape_cast %0 : vector<1x8x256xf32> to vector<8x256xf32>
    %c0_2 = arith.constant 0 : index
    %c0_3 = arith.constant 0 : index
    %c0_4 = arith.constant 0 : index
    %2 = vector.load %arg2[%c0_2, %c0_3, %c0_4] : memref<1x8x256xf32, #tpu.memory_space<vmem>>, vector<1x8x256xf32>
    %3 = vector.shape_cast %2 : vector<1x8x256xf32> to vector<8x256xf32>
    %4 = arith.subf %1, %3 : vector<8x256xf32>
    %5 = math.absf %4 : vector<8x256xf32>
    %cst = arith.constant dense<0.000000e+00> : vector<8xf32>
    %6 = vector.multi_reduction <add>, %5, %cst [1] : vector<8x256xf32> to vector<8xf32>
    %7 = vector.shape_cast %6 : vector<8xf32> to vector<8x1xf32>
    %cst_5 = arith.constant 3.906250e-03 : f32
    %8 = vector.broadcast %cst_5 : f32 to vector<8x1xf32>
    %9 = arith.mulf %7, %8 : vector<8x1xf32>
    %cst_6 = arith.constant dense<0xFF800000> : vector<8xf32>
    %10 = vector.multi_reduction <maximumf>, %5, %cst_6 [1] : vector<8x256xf32> to vector<8xf32>
    %11 = vector.shape_cast %10 : vector<8xf32> to vector<8x1xf32>
    %c0_7 = arith.constant 0 : index
    %c0_8 = arith.constant 0 : index
    %12 = vector.load %arg3[%c0_7, %c0_8] : memref<4x8xf32, #tpu.memory_space<vmem>>, vector<4x8xf32>
    %c0_9 = arith.constant 0 : index
    %c0_10 = arith.constant 0 : index
    %13 = vector.load %arg4[%c0_9, %c0_10] : memref<4x1xf32, #tpu.memory_space<vmem>>, vector<4x1xf32>
    %c0_11 = arith.constant 0 : index
    %c0_12 = arith.constant 0 : index
    %14 = vector.load %arg5[%c0_11, %c0_12] : memref<8x4xf32, #tpu.memory_space<vmem>>, vector<8x4xf32>
    %c0_13 = arith.constant 0 : index
    %c0_14 = arith.constant 0 : index
    %15 = vector.load %arg6[%c0_13, %c0_14] : memref<8x1xf32, #tpu.memory_space<vmem>>, vector<8x1xf32>
    %c0_15 = arith.constant 0 : index
    %c0_16 = arith.constant 0 : index
    %16 = vector.load %arg7[%c0_15, %c0_16] : memref<8x1xf32, #tpu.memory_space<vmem>>, vector<8x1xf32>
    %c0_17 = arith.constant 0 : index
    %c0_18 = arith.constant 0 : index
    %17 = vector.load %arg8[%c0_17, %c0_18] : memref<8x1xf32, #tpu.memory_space<vmem>>, vector<8x1xf32>
    %c0_19 = arith.constant 0 : index
    %c0_20 = arith.constant 0 : index
    %18 = vector.load %arg9[%c0_19, %c0_20] : memref<8x8xf32, #tpu.memory_space<vmem>>, vector<8x8xf32>
    %c0_21 = arith.constant 0 : index
    %c0_22 = arith.constant 0 : index
    %19 = vector.load %arg10[%c0_21, %c0_22] : memref<8x1xf32, #tpu.memory_space<vmem>>, vector<8x1xf32>
    %c0_23 = arith.constant 0 : index
    %c0_24 = arith.constant 0 : index
    %20 = vector.load %arg11[%c0_23, %c0_24] : memref<8x1xf32, #tpu.memory_space<vmem>>, vector<8x1xf32>
    %c0_25 = arith.constant 0 : index
    %c0_26 = arith.constant 0 : index
    %21 = vector.load %arg12[%c0_25, %c0_26] : memref<8x1xf32, #tpu.memory_space<vmem>>, vector<8x1xf32>
    %22 = tpu.iota {dimensions = array<i32: 1>} : vector<8x2xi32>
    %c0_i32 = arith.constant 0 : i32
    %23 = vector.broadcast %c0_i32 : i32 to vector<8x2xi32>
    %24 = arith.cmpi eq, %22, %23 : vector<8x2xi32>
    %25 = vector.shape_cast %9 : vector<8x1xf32> to vector<8x1xf32>
    %26 = vector.broadcast %25 : vector<8x1xf32> to vector<8x2xf32>
    %27 = vector.shape_cast %11 : vector<8x1xf32> to vector<8x1xf32>
    %28 = vector.broadcast %27 : vector<8x1xf32> to vector<8x2xf32>
    %29 = arith.select %24, %26, %28 : vector<8x2xi1>, vector<8x2xf32>
    %cst_27 = arith.constant dense<0.000000e+00> : vector<4x2xf32>
    %30 = tpu.matmul %12, %29, %cst_27 {dimension_numbers = #tpu.dot_dimension_numbers<[1], [0], [0], [1], [0, 0, 1, 1], [], []>} : vector<4x8xf32>, vector<8x2xf32>, vector<4x2xf32> -> vector<4x2xf32>
    %31 = vector.broadcast %13 : vector<4x1xf32> to vector<4x2xf32>
    %32 = arith.addf %30, %31 : vector<4x2xf32>
    %cst_28 = arith.constant 0.000000e+00 : f32
    %33 = vector.broadcast %cst_28 : f32 to vector<4x2xf32>
    %34 = arith.maximumf %32, %33 : vector<4x2xf32>
    %cst_29 = arith.constant dense<0.000000e+00> : vector<8x2xf32>
    %35 = tpu.matmul %14, %34, %cst_29 {dimension_numbers = #tpu.dot_dimension_numbers<[1], [0], [0], [1], [0, 0, 1, 1], [], []>} : vector<8x4xf32>, vector<4x2xf32>, vector<8x2xf32> -> vector<8x2xf32>
    %36 = vector.broadcast %15 : vector<8x1xf32> to vector<8x2xf32>
    %37 = arith.addf %35, %36 : vector<8x2xf32>
    %38 = vector.broadcast %16 : vector<8x1xf32> to vector<8x2xf32>
    %39 = arith.mulf %37, %38 : vector<8x2xf32>
    %40 = vector.broadcast %17 : vector<8x1xf32> to vector<8x2xf32>
    %41 = arith.addf %39, %40 : vector<8x2xf32>
    %cst_30 = arith.constant dense<0.000000e+00> : vector<8x2xf32>
    %42 = tpu.matmul %18, %41, %cst_30 {dimension_numbers = #tpu.dot_dimension_numbers<[1], [0], [0], [1], [0, 0, 1, 1], [], []>} : vector<8x8xf32>, vector<8x2xf32>, vector<8x2xf32> -> vector<8x2xf32>
    %43 = vector.broadcast %19 : vector<8x1xf32> to vector<8x2xf32>
    %44 = arith.addf %42, %43 : vector<8x2xf32>
    %45 = vector.extract_strided_slice %44 {offsets = [0, 0], sizes = [8, 1], strides = [1, 1]} : vector<8x2xf32> to vector<8x1xf32>
    %46 = vector.extract_strided_slice %44 {offsets = [0, 1], sizes = [8, 1], strides = [1, 1]} : vector<8x2xf32> to vector<8x1xf32>
    %47 = arith.mulf %20, %45 : vector<8x1xf32>
    %cst_31 = arith.constant 1.000000e+00 : f32
    %48 = vector.broadcast %cst_31 : f32 to vector<8x1xf32>
    %49 = arith.addf %48, %47 : vector<8x1xf32>
    %50 = arith.mulf %21, %46 : vector<8x1xf32>
    %51 = arith.addf %49, %50 : vector<8x1xf32>
    %52 = arith.mulf %20, %46 : vector<8x1xf32>
    %cst_32 = arith.constant 1.000000e+00 : f32
    %53 = vector.broadcast %cst_32 : f32 to vector<8x1xf32>
    %54 = arith.addf %53, %52 : vector<8x1xf32>
    %55 = arith.mulf %21, %45 : vector<8x1xf32>
    %56 = arith.addf %54, %55 : vector<8x1xf32>
    %57 = vector.broadcast %51 : vector<8x1xf32> to vector<8x256xf32>
    %58 = arith.mulf %1, %57 : vector<8x256xf32>
    %c0_33 = arith.constant 0 : index
    %c0_34 = arith.constant 0 : index
    %c0_35 = arith.constant 0 : index
    %59 = vector.load %arg13[%c0_33, %c0_34, %c0_35] : memref<1x8x256xf32, #tpu.memory_space<vmem>>, vector<1x8x256xf32>
    %60 = vector.shape_cast %59 : vector<1x8x256xf32> to vector<8x256xf32>
    %61 = vector.shape_cast %58 : vector<8x256xf32> to vector<1x8x256xf32>
    tpu.vector_store %arg13[%c0_33, %c0_34, %c0_35], %61 {strides = array<i32>} : memref<1x8x256xf32, #tpu.memory_space<vmem>>, vector<1x8x256xf32>,
    %62 = vector.broadcast %56 : vector<8x1xf32> to vector<8x256xf32>
    %63 = arith.mulf %3, %62 : vector<8x256xf32>
    %c0_36 = arith.constant 0 : index
    %c0_37 = arith.constant 0 : index
    %c0_38 = arith.constant 0 : index
    %64 = vector.load %arg14[%c0_36, %c0_37, %c0_38] : memref<1x8x256xf32, #tpu.memory_space<vmem>>, vector<1x8x256xf32>
    %65 = vector.shape_cast %64 : vector<1x8x256xf32> to vector<8x256xf32>
    %66 = vector.shape_cast %63 : vector<8x256xf32> to vector<1x8x256xf32>
    tpu.vector_store %arg14[%c0_36, %c0_37, %c0_38], %66 {strides = array<i32>} : memref<1x8x256xf32, #tpu.memory_space<vmem>>, vector<1x8x256xf32>,
    return
  }
  func.func @transform_0(%arg0: i32) -> (i32, i32, i32) {
    %c0_i32 = arith.constant 0 : i32
    %c0_i32_0 = arith.constant 0 : i32
    %c0_i32_1 = arith.constant 0 : i32
    return %arg0, %c0_i32, %c0_i32_0 : i32, i32, i32
  }
  func.func @transform_1(%arg0: i32) -> (i32, i32, i32) {
    %c0_i32 = arith.constant 0 : i32
    %c0_i32_0 = arith.constant 0 : i32
    %c0_i32_1 = arith.constant 0 : i32
    return %arg0, %c0_i32, %c0_i32_0 : i32, i32, i32
  }
  func.func @transform_2(%arg0: i32) -> (i32, i32) {
    %c0_i32 = arith.constant 0 : i32
    %c0_i32_0 = arith.constant 0 : i32
    %c0_i32_1 = arith.constant 0 : i32
    return %c0_i32, %c0_i32_0 : i32, i32
  }
  func.func @transform_3(%arg0: i32) -> (i32, i32) {
    %c0_i32 = arith.constant 0 : i32
    %c0_i32_0 = arith.constant 0 : i32
    %c0_i32_1 = arith.constant 0 : i32
    return %c0_i32, %c0_i32_0 : i32, i32
  }
  func.func @transform_4(%arg0: i32) -> (i32, i32) {
    %c0_i32 = arith.constant 0 : i32
    %c0_i32_0 = arith.constant 0 : i32
    %c0_i32_1 = arith.constant 0 : i32
    return %c0_i32, %c0_i32_0 : i32, i32
  }
  func.func @transform_5(%arg0: i32) -> (i32, i32) {
    %c0_i32 = arith.constant 0 : i32
    %c0_i32_0 = arith.constant 0 : i32
    %c0_i32_1 = arith.constant 0 : i32
    return %c0_i32, %c0_i32_0 : i32, i32
  }
  func.func @transform_6(%arg0: i32) -> (i32, i32) {
    %c0_i32 = arith.constant 0 : i32
    %c0_i32_0 = arith.constant 0 : i32
    %c0_i32_1 = arith.constant 0 : i32
    return %c0_i32, %c0_i32_0 : i32, i32
  }
  func.func @transform_7(%arg0: i32) -> (i32, i32) {
    %c0_i32 = arith.constant 0 : i32
    %c0_i32_0 = arith.constant 0 : i32
    %c0_i32_1 = arith.constant 0 : i32
    return %c0_i32, %c0_i32_0 : i32, i32
  }
  func.func @transform_8(%arg0: i32) -> (i32, i32) {
    %c0_i32 = arith.constant 0 : i32
    %c0_i32_0 = arith.constant 0 : i32
    %c0_i32_1 = arith.constant 0 : i32
    return %c0_i32, %c0_i32_0 : i32, i32
  }
  func.func @transform_9(%arg0: i32) -> (i32, i32) {
    %c0_i32 = arith.constant 0 : i32
    %c0_i32_0 = arith.constant 0 : i32
    %c0_i32_1 = arith.constant 0 : i32
    return %c0_i32, %c0_i32_0 : i32, i32
  }
  func.func @transform_10(%arg0: i32) -> (i32, i32) {
    %c0_i32 = arith.constant 0 : i32
    %c0_i32_0 = arith.constant 0 : i32
    %c0_i32_1 = arith.constant 0 : i32
    return %c0_i32, %c0_i32_0 : i32, i32
  }
  func.func @transform_11(%arg0: i32) -> (i32, i32) {
    %c0_i32 = arith.constant 0 : i32
    %c0_i32_0 = arith.constant 0 : i32
    %c0_i32_1 = arith.constant 0 : i32
    return %c0_i32, %c0_i32_0 : i32, i32
  }
  func.func @transform_12(%arg0: i32) -> (i32, i32, i32) {
    %c0_i32 = arith.constant 0 : i32
    %c0_i32_0 = arith.constant 0 : i32
    %c0_i32_1 = arith.constant 0 : i32
    return %arg0, %c0_i32, %c0_i32_0 : i32, i32, i32
  }
  func.func @transform_13(%arg0: i32) -> (i32, i32, i32) {
    %c0_i32 = arith.constant 0 : i32
    %c0_i32_0 = arith.constant 0 : i32
    %c0_i32_1 = arith.constant 0 : i32
    return %arg0, %c0_i32, %c0_i32_0 : i32, i32, i32
  }
}

</mosaic_0001>

<llo_original>
// kernel: tpu_custom_call.1
$region0: #{tpu_custom_call.1}
  #allocation0 [shape = 'u32[]', space=smem, size = 0x4, offset = 0x4, fixed_abs, tag = 'smem constant byte address 0x4 - core index']
  #allocation1 [shape = 'u32[72,128]{1,0:T(1,128)}', space=vmem, size = 0x9000, scoped, tag = 'internal scratch']
  %s0 = inlined_call_operand.hbm [shape: f32[2,8,256], index: 0, kind: input, shape index: {}]
  %s1 = inlined_call_operand.hbm [shape: f32[2,8,256], index: 1, kind: input, shape index: {}]
  %s2 = inlined_call_operand.vmem [shape: f32[4,8], index: 2, kind: input, shape index: {}]
  %s3 = inlined_call_operand.vmem [shape: f32[4,1], index: 3, kind: input, shape index: {}]
  %s4 = inlined_call_operand.vmem [shape: f32[8,4], index: 4, kind: input, shape index: {}]
  %s5 = inlined_call_operand.vmem [shape: f32[8,1], index: 5, kind: input, shape index: {}]
  %s6 = inlined_call_operand.vmem [shape: f32[8,1], index: 6, kind: input, shape index: {}]
  %s7 = inlined_call_operand.vmem [shape: f32[8,1], index: 7, kind: input, shape index: {}]
  %s8 = inlined_call_operand.vmem [shape: f32[8,8], index: 8, kind: input, shape index: {}]
  %s9 = inlined_call_operand.vmem [shape: f32[8,1], index: 9, kind: input, shape index: {}]
  %s10 = inlined_call_operand.vmem [shape: f32[8,1], index: 10, kind: input, shape index: {}]
  %s11 = inlined_call_operand.vmem [shape: f32[8,1], index: 11, kind: input, shape index: {}]
  %s12 = inlined_call_operand.hbm [shape: f32[2,8,256], index: 12, kind: output, shape index: {0}]
  %s13 = inlined_call_operand.hbm [shape: f32[2,8,256], index: 13, kind: output, shape index: {1}]
  %14 = xla_tuple %s12, %s13
  %s15 = sld [smem:[#allocation0]]
  $region97: #{tpu_custom_call.1} parent=0
    _
  %s17 = ssub.s32 1, %s15
  %s18 = scalar_select 0, %s17, %s15
  $region1: #{tpu_custom_call.1} parent=0
    #allocation2 [shape = 'u8[16384]{0}', space=vmem, size = 0x4000, scoped, tag = 'input window, operand 0']
    #allocation3 [shape = 's32[2]{0}', space=sflag, size = 0x8, scoped, tag = 'scoped memory for tpu_custom_call.1']
    #allocation4 [shape = 's32[2]{0}', space=sflag, size = 0x8, scoped, tag = 'scoped memory for tpu_custom_call.1']
    #allocation5 [shape = 'u8[16384]{0}', space=vmem, size = 0x4000, scoped, tag = 'input window, operand 1']
    #allocation6 [shape = 's32[2]{0}', space=sflag, size = 0x8, scoped, tag = 'scoped memory for tpu_custom_call.1']
    #allocation7 [shape = 'u8[16384]{0}', space=vmem, size = 0x4000, scoped, tag = 'output window, operand 0']
    #allocation8 [shape = 'u8[16384]{0}', space=vmem, size = 0x4000, scoped, tag = 'output window, operand 1']
    #allocation9 [shape = 's32[2]{0}', space=sflag, size = 0x8, scoped, tag = 'scoped memory for tpu_custom_call.1']
    %19 = vsyncpa [#allocation3], 0
    %s20 = scalar_lea.sflag [#allocation3], 1
    %21 = vsyncpa %s20, 0
    %22 = vsyncpa [#allocation6], 0
    %s23 = scalar_lea.sflag [#allocation6], 1
    %24 = vsyncpa %s23, 0
    %25 = vsyncpa [#allocation4], 0
    %s26 = scalar_lea.sflag [#allocation4], 1
    %27 = vsyncpa %s26, 0
    %28 = vsyncpa [#allocation9], 0
    %s29 = scalar_lea.sflag [#allocation9], 1
    %30 = vsyncpa %s29, 0
    loop: start=0, step=1, limit=4
    $region2: #{tpu_custom_call.1} parent=1 // loop_pre_header
      _
    $region3: #{tpu_custom_call.1} parent=1 // loop_header
      %s32 = sphi 0, %s36
      %p33 = scmp.ge.s32.totalorder %s32, 4
      %s42 = sphi 0, %s44
      %s45 = sphi 0, %s42
      %s46 = sphi 0, %s45
      %s62 = sphi 0, %s46
      %s68 = sphi 0, %s70
      %s71 = sphi 0, %s68
      %s72 = sphi 0, %s71
      %s88 = sphi 0, %s72
      %s92 = sphi 0, %s92
      %s94 = sphi 0, %s92
      %s95 = sphi 0, %s94
      %s109 = sphi 0, %s95
      %s113 = sphi 0, %s113
      %s115 = sphi 0, %s113
      %s116 = sphi 0, %s115
      %s130 = sphi 0, %s116
      %s134 = sphi 0, %s134
      %s136 = sphi 0, %s134
      %s137 = sphi 0, %s136
      %s151 = sphi 0, %s137
      %s155 = sphi 0, %s155
      %s157 = sphi 0, %s155
      %s158 = sphi 0, %s157
      %s172 = sphi 0, %s158
      %s176 = sphi 0, %s176
      %s178 = sphi 0, %s176
      %s179 = sphi 0, %s178
      %s193 = sphi 0, %s179
      %s197 = sphi 0, %s197
      %s199 = sphi 0, %s197
      %s200 = sphi 0, %s199
      %s214 = sphi 0, %s200
      %s218 = sphi 0, %s218
      %s220 = sphi 0, %s218
      %s221 = sphi 0, %s220
      %s235 = sphi 0, %s221
      %s239 = sphi 0, %s239
      %s241 = sphi 0, %s239
      %s242 = sphi 0, %s241
      %s256 = sphi 0, %s242
      %s260 = sphi 0, %s260
      %s262 = sphi 0, %s260
      %s263 = sphi 0, %s262
      %s277 = sphi 0, %s263
      %s281 = sphi 0, %s281
      %s283 = sphi 0, %s281
      %s284 = sphi 0, %s283
      %s298 = sphi 0, %s284
      %s304 = sphi 0, %s306
      %s307 = sphi 0, %s304
      %s308 = sphi 0, %s307
      %s324 = sphi 0, %s308
      %s330 = sphi 0, %s332
      %s333 = sphi 0, %s330
      %s334 = sphi 0, %s333
      %s350 = sphi 0, %s334
    $region4: #{tpu_custom_call.1} parent=1 // loop_header_branch
      %35 = sbr.rel (%p33) target = $region8
    $region5: #{tpu_custom_call.1} parent=1 // loop_body
      %s37 = ssub.s32 %s32, 1
      %s38 = ssub.s32 %s32, 2
      %s39 = sadd.s32 %s32, 1
      %s40 = ssub.s32 %s32, %s39
      %p41 = scmp.eq.s32.totalorder %s40, 0
      %s43 = sadd.s32 %s42, 1
      %s44 = scalar_select %p41, %s42, %s43
      %p47 = pneg %p41
      %p48 = scmp.eq.s32.totalorder %s32, 1
      %p49 = por %p47, %p48
      %p50 = scmp.ne.s32.totalorder %s42, %s45
      %p51 = scmp.eq.s32.totalorder %s32, 0
      %p52 = por %p50, %p51
      %p53 = scmp.ne.s32.totalorder %s42, %s45
      %p54 = scmp.eq.s32.totalorder %s37, 1
      %p55 = por %p53, %p54
      %p56 = scmp.ne.s32.totalorder %s45, %s46
      %p57 = scmp.eq.s32.totalorder %s37, 0
      %p58 = por %p56, %p57
      %p59 = scmp.ne.s32.totalorder %s45, %s46
      %p60 = scmp.eq.s32.totalorder %s38, 1
      %p61 = por %p59, %p60
      %p63 = scmp.ne.s32.totalorder %s46, %s62
      %p64 = scmp.eq.s32.totalorder %s38, 0
      %p65 = por %p63, %p64
      %s66 = ssub.s32 %s32, %s39
      %p67 = scmp.eq.s32.totalorder %s66, 0
      %s69 = sadd.s32 %s68, 1
      %s70 = scalar_select %p67, %s68, %s69
      %p73 = pneg %p67
      %p74 = scmp.eq.s32.totalorder %s32, 1
      %p75 = por %p73, %p74
      %p76 = scmp.ne.s32.totalorder %s68, %s71
      %p77 = scmp.eq.s32.totalorder %s32, 0
      %p78 = por %p76, %p77
      %p79 = scmp.ne.s32.totalorder %s68, %s71
      %p80 = scmp.eq.s32.totalorder %s37, 1
      %p81 = por %p79, %p80
      %p82 = scmp.ne.s32.totalorder %s71, %s72
      %p83 = scmp.eq.s32.totalorder %s37, 0
      %p84 = por %p82, %p83
      %p85 = scmp.ne.s32.totalorder %s71, %s72
      %p86 = scmp.eq.s32.totalorder %s38, 1
      %p87 = por %p85, %p86
      %p89 = scmp.ne.s32.totalorder %s72, %s88
      %p90 = scmp.eq.s32.totalorder %s38, 0
      %p91 = por %p89, %p90
      %s93 = sadd.s32 %s92, 1
      %p96 = scmp.eq.s32.totalorder %s32, 1
      %p97 = scmp.ne.s32.totalorder %s92, %s94
      %p98 = scmp.eq.s32.totalorder %s32, 0
      %p99 = por %p97, %p98
      %p100 = scmp.ne.s32.totalorder %s92, %s94
      %p101 = scmp.eq.s32.totalorder %s37, 1
      %p102 = por %p100, %p101
      %p103 = scmp.ne.s32.totalorder %s94, %s95
      %p104 = scmp.eq.s32.totalorder %s37, 0
      %p105 = por %p103, %p104
      %p106 = scmp.ne.s32.totalorder %s94, %s95
      %p107 = scmp.eq.s32.totalorder %s38, 1
      %p108 = por %p106, %p107
      %p110 = scmp.ne.s32.totalorder %s95, %s109
      %p111 = scmp.eq.s32.totalorder %s38, 0
      %p112 = por %p110, %p111
      %s114 = sadd.s32 %s113, 1
      %p117 = scmp.eq.s32.totalorder %s32, 1
      %p118 = scmp.ne.s32.totalorder %s113, %s115
      %p119 = scmp.eq.s32.totalorder %s32, 0
      %p120 = por %p118, %p119
      %p121 = scmp.ne.s32.totalorder %s113, %s115
      %p122 = scmp.eq.s32.totalorder %s37, 1
      %p123 = por %p121, %p122
      %p124 = scmp.ne.s32.totalorder %s115, %s116
      %p125 = scmp.eq.s32.totalorder %s37, 0
      %p126 = por %p124, %p125
      %p127 = scmp.ne.s32.totalorder %s115, %s116
      %p128 = scmp.eq.s32.totalorder %s38, 1
      %p129 = por %p127, %p128
      %p131 = scmp.ne.s32.totalorder %s116, %s130
      %p132 = scmp.eq.s32.totalorder %s38, 0
      %p133 = por %p131, %p132
      %s135 = sadd.s32 %s134, 1
      %p138 = scmp.eq.s32.totalorder %s32, 1
      %p139 = scmp.ne.s32.totalorder %s134, %s136
      %p140 = scmp.eq.s32.totalorder %s32, 0
      %p141 = por %p139, %p140
      %p142 = scmp.ne.s32.totalorder %s134, %s136
      %p143 = scmp.eq.s32.totalorder %s37, 1
      %p144 = por %p142, %p143
      %p145 = scmp.ne.s32.totalorder %s136, %s137
      %p146 = scmp.eq.s32.totalorder %s37, 0
      %p147 = por %p145, %p146
      %p148 = scmp.ne.s32.totalorder %s136, %s137
      %p149 = scmp.eq.s32.totalorder %s38, 1
      %p150 = por %p148, %p149
      %p152 = scmp.ne.s32.totalorder %s137, %s151
      %p153 = scmp.eq.s32.totalorder %s38, 0
      %p154 = por %p152, %p153
      %s156 = sadd.s32 %s155, 1
      %p159 = scmp.eq.s32.totalorder %s32, 1
      %p160 = scmp.ne.s32.totalorder %s155, %s157
      %p161 = scmp.eq.s32.totalorder %s32, 0
      %p162 = por %p160, %p161
      %p163 = scmp.ne.s32.totalorder %s155, %s157
      %p164 = scmp.eq.s32.totalorder %s37, 1
      %p165 = por %p163, %p164
      %p166 = scmp.ne.s32.totalorder %s157, %s158
      %p167 = scmp.eq.s32.totalorder %s37, 0
      %p168 = por %p166, %p167
      %p169 = scmp.ne.s32.totalorder %s157, %s158
      %p170 = scmp.eq.s32.totalorder %s38, 1
      %p171 = por %p169, %p170
      %p173 = scmp.ne.s32.totalorder %s158, %s172
      %p174 = scmp.eq.s32.totalorder %s38, 0
      %p175 = por %p173, %p174
      %s177 = sadd.s32 %s176, 1
      %p180 = scmp.eq.s32.totalorder %s32, 1
      %p181 = scmp.ne.s32.totalorder %s176, %s178
      %p182 = scmp.eq.s32.totalorder %s32, 0
      %p183 = por %p181, %p182
      %p184 = scmp.ne.s32.totalorder %s176, %s178
      %p185 = scmp.eq.s32.totalorder %s37, 1
      %p186 = por %p184, %p185
      %p187 = scmp.ne.s32.totalorder %s178, %s179
      %p188 = scmp.eq.s32.totalorder %s37, 0
      %p189 = por %p187, %p188
      %p190 = scmp.ne.s32.totalorder %s178, %s179
      %p191 = scmp.eq.s32.totalorder %s38, 1
      %p192 = por %p190, %p191
      %p194 = scmp.ne.s32.totalorder %s179, %s193
      %p195 = scmp.eq.s32.totalorder %s38, 0
      %p196 = por %p194, %p195
      %s198 = sadd.s32 %s197, 1
      %p201 = scmp.eq.s32.totalorder %s32, 1
      %p202 = scmp.ne.s32.totalorder %s197, %s199
      %p203 = scmp.eq.s32.totalorder %s32, 0
      %p204 = por %p202, %p203
      %p205 = scmp.ne.s32.totalorder %s197, %s199
      %p206 = scmp.eq.s32.totalorder %s37, 1
      %p207 = por %p205, %p206
      %p208 = scmp.ne.s32.totalorder %s199, %s200
      %p209 = scmp.eq.s32.totalorder %s37, 0
      %p210 = por %p208, %p209
      %p211 = scmp.ne.s32.totalorder %s199, %s200
      %p212 = scmp.eq.s32.totalorder %s38, 1
      %p213 = por %p211, %p212
      %p215 = scmp.ne.s32.totalorder %s200, %s214
      %p216 = scmp.eq.s32.totalorder %s38, 0
      %p217 = por %p215, %p216
      %s219 = sadd.s32 %s218, 1
      %p222 = scmp.eq.s32.totalorder %s32, 1
      %p223 = scmp.ne.s32.totalorder %s218, %s220
      %p224 = scmp.eq.s32.totalorder %s32, 0
      %p225 = por %p223, %p224
      %p226 = scmp.ne.s32.totalorder %s218, %s220
      %p227 = scmp.eq.s32.totalorder %s37, 1
      %p228 = por %p226, %p227
      %p229 = scmp.ne.s32.totalorder %s220, %s221
      %p230 = scmp.eq.s32.totalorder %s37, 0
      %p231 = por %p229, %p230
      %p232 = scmp.ne.s32.totalorder %s220, %s221
      %p233 = scmp.eq.s32.totalorder %s38, 1
      %p234 = por %p232, %p233
      %p236 = scmp.ne.s32.totalorder %s221, %s235
      %p237 = scmp.eq.s32.totalorder %s38, 0
      %p238 = por %p236, %p237
      %s240 = sadd.s32 %s239, 1
      %p243 = scmp.eq.s32.totalorder %s32, 1
      %p244 = scmp.ne.s32.totalorder %s239, %s241
      %p245 = scmp.eq.s32.totalorder %s32, 0
      %p246 = por %p244, %p245
      %p247 = scmp.ne.s32.totalorder %s239, %s241
      %p248 = scmp.eq.s32.totalorder %s37, 1
      %p249 = por %p247, %p248
      %p250 = scmp.ne.s32.totalorder %s241, %s242
      %p251 = scmp.eq.s32.totalorder %s37, 0
      %p252 = por %p250, %p251
      %p253 = scmp.ne.s32.totalorder %s241, %s242
      %p254 = scmp.eq.s32.totalorder %s38, 1
      %p255 = por %p253, %p254
      %p257 = scmp.ne.s32.totalorder %s242, %s256
      %p258 = scmp.eq.s32.totalorder %s38, 0
      %p259 = por %p257, %p258
      %s261 = sadd.s32 %s260, 1
      %p264 = scmp.eq.s32.totalorder %s32, 1
      %p265 = scmp.ne.s32.totalorder %s260, %s262
      %p266 = scmp.eq.s32.totalorder %s32, 0
      %p267 = por %p265, %p266
      %p268 = scmp.ne.s32.totalorder %s260, %s262
      %p269 = scmp.eq.s32.totalorder %s37, 1
      %p270 = por %p268, %p269
      %p271 = scmp.ne.s32.totalorder %s262, %s263
      %p272 = scmp.eq.s32.totalorder %s37, 0
      %p273 = por %p271, %p272
      %p274 = scmp.ne.s32.totalorder %s262, %s263
      %p275 = scmp.eq.s32.totalorder %s38, 1
      %p276 = por %p274, %p275
      %p278 = scmp.ne.s32.totalorder %s263, %s277
      %p279 = scmp.eq.s32.totalorder %s38, 0
      %p280 = por %p278, %p279
      %s282 = sadd.s32 %s281, 1
      %p285 = scmp.eq.s32.totalorder %s32, 1
      %p286 = scmp.ne.s32.totalorder %s281, %s283
      %p287 = scmp.eq.s32.totalorder %s32, 0
      %p288 = por %p286, %p287
      %p289 = scmp.ne.s32.totalorder %s281, %s283
      %p290 = scmp.eq.s32.totalorder %s37, 1
      %p291 = por %p289, %p290
      %p292 = scmp.ne.s32.totalorder %s283, %s284
      %p293 = scmp.eq.s32.totalorder %s37, 0
      %p294 = por %p292, %p293
      %p295 = scmp.ne.s32.totalorder %s283, %s284
      %p296 = scmp.eq.s32.totalorder %s38, 1
      %p297 = por %p295, %p296
      %p299 = scmp.ne.s32.totalorder %s284, %s298
      %p300 = scmp.eq.s32.totalorder %s38, 0
      %p301 = por %p299, %p300
      %s302 = ssub.s32 %s32, %s39
      %p303 = scmp.eq.s32.totalorder %s302, 0
      %s305 = sadd.s32 %s304, 1
      %s306 = scalar_select %p303, %s304, %s305
      %p309 = pneg %p303
      %p310 = scmp.eq.s32.totalorder %s32, 1
      %p311 = por %p309, %p310
      %p312 = scmp.ne.s32.totalorder %s304, %s307
      %p313 = scmp.eq.s32.totalorder %s32, 0
      %p314 = por %p312, %p313
      %p315 = scmp.ne.s32.totalorder %s304, %s307
      %p316 = scmp.eq.s32.totalorder %s37, 1
      %p317 = por %p315, %p316
      %p318 = scmp.ne.s32.totalorder %s307, %s308
      %p319 = scmp.eq.s32.totalorder %s37, 0
      %p320 = por %p318, %p319
      %p321 = scmp.ne.s32.totalorder %s307, %s308
      %p322 = scmp.eq.s32.totalorder %s38, 1
      %p323 = por %p321, %p322
      %p325 = scmp.ne.s32.totalorder %s308, %s324
      %p326 = scmp.eq.s32.totalorder %s38, 0
      %p327 = por %p325, %p326
      %s328 = ssub.s32 %s32, %s39
      %p329 = scmp.eq.s32.totalorder %s328, 0
      %s331 = sadd.s32 %s330, 1
      %s332 = scalar_select %p329, %s330, %s331
      %p335 = pneg %p329
      %p336 = scmp.eq.s32.totalorder %s32, 1
      %p337 = por %p335, %p336
      %p338 = scmp.ne.s32.totalorder %s330, %s333
      %p339 = scmp.eq.s32.totalorder %s32, 0
      %p340 = por %p338, %p339
      %p341 = scmp.ne.s32.totalorder %s330, %s333
      %p342 = scmp.eq.s32.totalorder %s37, 1
      %p343 = por %p341, %p342
      %p344 = scmp.ne.s32.totalorder %s333, %s334
      %p345 = scmp.eq.s32.totalorder %s37, 0
      %p346 = por %p344, %p345
      %p347 = scmp.ne.s32.totalorder %s333, %s334
      %p348 = scmp.eq.s32.totalorder %s38, 1
      %p349 = por %p347, %p348
      %p351 = scmp.ne.s32.totalorder %s334, %s350
      %p352 = scmp.eq.s32.totalorder %s38, 0
      %p353 = por %p351, %p352
      %p354 = scmp.le.s32.totalorder 1, %s32
      %p355 = scmp.lt.s32.totalorder %s32, 3
      %p356 = pnand %p354, %p355
      %p357 = pneg %p356
      // Predicated region
      $region9: #{tpu_custom_call.1} parent=5 // pred_check
        _
      $region10: #{tpu_custom_call.1} parent=5 // pred_check_branch
        %359 = sbr.rel (%p356) target = $region12
      $region11: #{tpu_custom_call.1} parent=5 // pred_region
        %s360 = ssub.s32 %s32, 1
        // Predicated region
        $region13: #{tpu_custom_call.1} parent=11 // pred_check
          %p361 = pneg %p105
        $region14: #{tpu_custom_call.1} parent=11 // pred_check_branch
          %363 = sbr.rel (%p361) target = $region16
        $region15: #{tpu_custom_call.1} parent=11 // pred_region
          _
        $region16: #{tpu_custom_call.1} parent=11 // pred_fallthru
          _
        // Predicated region
        $region17: #{tpu_custom_call.1} parent=11 // pred_check
          %p364 = pneg %p126
        $region18: #{tpu_custom_call.1} parent=11 // pred_check_branch
          %366 = sbr.rel (%p364) target = $region20
        $region19: #{tpu_custom_call.1} parent=11 // pred_region
          _
        $region20: #{tpu_custom_call.1} parent=11 // pred_fallthru
          _
        // Predicated region
        $region21: #{tpu_custom_call.1} parent=11 // pred_check
          %p367 = pneg %p147
        $region22: #{tpu_custom_call.1} parent=11 // pred_check_branch
          %369 = sbr.rel (%p367) target = $region24
        $region23: #{tpu_custom_call.1} parent=11 // pred_region
          _
        $region24: #{tpu_custom_call.1} parent=11 // pred_fallthru
          _
        // Predicated region
        $region25: #{tpu_custom_call.1} parent=11 // pred_check
          %p370 = pneg %p168
        $region26: #{tpu_custom_call.1} parent=11 // pred_check_branch
          %372 = sbr.rel (%p370) target = $region28
        $region27: #{tpu_custom_call.1} parent=11 // pred_region
          _
        $region28: #{tpu_custom_call.1} parent=11 // pred_fallthru
          _
        // Predicated region
        $region29: #{tpu_custom_call.1} parent=11 // pred_check
          %p373 = pneg %p189
        $region30: #{tpu_custom_call.1} parent=11 // pred_check_branch
          %375 = sbr.rel (%p373) target = $region32
        $region31: #{tpu_custom_call.1} parent=11 // pred_region
          _
        $region32: #{tpu_custom_call.1} parent=11 // pred_fallthru
          _
        // Predicated region
        $region33: #{tpu_custom_call.1} parent=11 // pred_check
          %p376 = pneg %p210
        $region34: #{tpu_custom_call.1} parent=11 // pred_check_branch
          %378 = sbr.rel (%p376) target = $region36
        $region35: #{tpu_custom_call.1} parent=11 // pred_region
          _
        $region36: #{tpu_custom_call.1} parent=11 // pred_fallthru
          _
        // Predicated region
        $region37: #{tpu_custom_call.1} parent=11 // pred_check
          %p379 = pneg %p231
        $region38: #{tpu_custom_call.1} parent=11 // pred_check_branch
          %381 = sbr.rel (%p379) target = $region40
        $region39: #{tpu_custom_call.1} parent=11 // pred_region
          _
        $region40: #{tpu_custom_call.1} parent=11 // pred_fallthru
          _
        // Predicated region
        $region41: #{tpu_custom_call.1} parent=11 // pred_check
          %p382 = pneg %p252
        $region42: #{tpu_custom_call.1} parent=11 // pred_check_branch
          %384 = sbr.rel (%p382) target = $region44
        $region43: #{tpu_custom_call.1} parent=11 // pred_region
          _
        $region44: #{tpu_custom_call.1} parent=11 // pred_fallthru
          _
        // Predicated region
        $region45: #{tpu_custom_call.1} parent=11 // pred_check
          %p385 = pneg %p273
        $region46: #{tpu_custom_call.1} parent=11 // pred_check_branch
          %387 = sbr.rel (%p385) target = $region48
        $region47: #{tpu_custom_call.1} parent=11 // pred_region
          _
        $region48: #{tpu_custom_call.1} parent=11 // pred_fallthru
          _
        // Predicated region
        $region49: #{tpu_custom_call.1} parent=11 // pred_check
          %p388 = pneg %p294
        $region50: #{tpu_custom_call.1} parent=11 // pred_check_branch
          %390 = sbr.rel (%p388) target = $region52
        $region51: #{tpu_custom_call.1} parent=11 // pred_region
          _
        $region52: #{tpu_custom_call.1} parent=11 // pred_fallthru
          _
      $region12: #{tpu_custom_call.1} parent=5 // pred_fallthru
        _
      %p391 = scmp.lt.s32.totalorder %s32, 2
      // Predicated region
      $region53: #{tpu_custom_call.1} parent=5 // pred_check
        %p392 = pneg %p391
      $region54: #{tpu_custom_call.1} parent=5 // pred_check_branch
        %394 = sbr.rel (%p392) target = $region56
      $region55: #{tpu_custom_call.1} parent=5 // pred_region
        // Predicated region
        $region57: #{tpu_custom_call.1} parent=55 // pred_check
          %p395 = pneg %p52
        $region58: #{tpu_custom_call.1} parent=55 // pred_check_branch
          %397 = sbr.rel (%p395) target = $region60
        $region59: #{tpu_custom_call.1} parent=55 // pred_region
          %s398 = sand.u32 %s42, 1
          %s399 = scalar_lea.sflag [#allocation3], %s398
          %s400 = sand.u32 %s42, 1
          %s401 = smul.addr %s400, 16
          %s402 = scalar_lea.vmem [#allocation2], %s401
          %404 = vsyncadd %s399, 0
          %s405 = smul.addr %s32, 2
          %s406 = smul.addr %s405, 8
          %s407 = scalar_lea.hbm %s0, %s406
          %s409 = sshll.u32 %s407, 4
          %s410 = int_to_ptr.hbm [resolvable:$true] %s409
          %s411 = sshll.u32 %s402, 4
          %s412 = int_to_ptr.vmem [resolvable:$true] %s411
          %414 = dma.hbm_to_vmem [thread:$0]  %s410, 256, %s412, %s399
        $region60: #{tpu_custom_call.1} parent=55 // pred_fallthru
          _
        // Predicated region
        $region61: #{tpu_custom_call.1} parent=55 // pred_check
          %p415 = pneg %p78
        $region62: #{tpu_custom_call.1} parent=55 // pred_check_branch
          %417 = sbr.rel (%p415) target = $region64
        $region63: #{tpu_custom_call.1} parent=55 // pred_region
          %s418 = sand.u32 %s68, 1
          %s419 = scalar_lea.sflag [#allocation6], %s418
          %s420 = sand.u32 %s68, 1
          %s421 = smul.addr %s420, 16
          %s422 = scalar_lea.vmem [#allocation5], %s421
          %424 = vsyncadd %s419, 0
          %s425 = smul.addr %s32, 2
          %s426 = smul.addr %s425, 8
          %s427 = scalar_lea.hbm %s1, %s426
          %s429 = sshll.u32 %s427, 4
          %s430 = int_to_ptr.hbm [resolvable:$true] %s429
          %s431 = sshll.u32 %s422, 4
          %s432 = int_to_ptr.vmem [resolvable:$true] %s431
          %434 = dma.hbm_to_vmem [thread:$0]  %s430, 256, %s432, %s419
        $region64: #{tpu_custom_call.1} parent=55 // pred_fallthru
          _
      $region56: #{tpu_custom_call.1} parent=5 // pred_fallthru
        _
      %p435 = scmp.le.s32.totalorder 1, %s32
      %p436 = scmp.lt.s32.totalorder %s32, 3
      %p437 = pnand %p435, %p436
      %p438 = pneg %p437
      // Predicated region
      $region65: #{tpu_custom_call.1} parent=5 // pred_check
        _
      $region66: #{tpu_custom_call.1} parent=5 // pred_check_branch
        %440 = sbr.rel (%p437) target = $region68
      $region67: #{tpu_custom_call.1} parent=5 // pred_region
        %s441 = ssub.s32 %s32, 1
        %s442 = sand.u32 %s45, 1
        %s443 = scalar_lea.sflag [#allocation3], %s442
        %s444 = sand.u32 %s45, 1
        %s445 = smul.addr %s444, 16
        %s446 = scalar_lea.vmem [#allocation2], %s445
        // Predicated region
        $region69: #{tpu_custom_call.1} parent=67 // pred_check
          %p447 = pneg %p58
        $region70: #{tpu_custom_call.1} parent=67 // pred_check_branch
          %449 = sbr.rel (%p447) target = $region72
        $region71: #{tpu_custom_call.1} parent=67 // pred_region
          %451 = dma.done %s443, 256
        $region72: #{tpu_custom_call.1} parent=67 // pred_fallthru
          _
        %s452 = sand.u32 %s71, 1
        %s453 = scalar_lea.sflag [#allocation6], %s452
        %s454 = sand.u32 %s71, 1
        %s455 = smul.addr %s454, 16
        %s456 = scalar_lea.vmem [#allocation5], %s455
        // Predicated region
        $region73: #{tpu_custom_call.1} parent=67 // pred_check
          %p457 = pneg %p84
        $region74: #{tpu_custom_call.1} parent=67 // pred_check_branch
          %459 = sbr.rel (%p457) target = $region76
        $region75: #{tpu_custom_call.1} parent=67 // pred_region
          %461 = dma.done %s453, 256
        $region76: #{tpu_custom_call.1} parent=67 // pred_fallthru
          _
        %s462 = sand.u32 %s45, 1
        %s463 = scalar_lea.sflag [#allocation3], %s462
        %s464 = sand.u32 %s45, 1
        %s465 = smul.addr %s464, 16
        %s466 = scalar_lea.vmem [#allocation2], %s465
        %p467 = pneg %p58
        %p468 = pneg %p55
        %s469 = sand.u32 %s71, 1
        %s470 = scalar_lea.sflag [#allocation6], %s469
        %s471 = sand.u32 %s71, 1
        %s472 = smul.addr %s471, 16
        %s473 = scalar_lea.vmem [#allocation5], %s472
        %p474 = pneg %p84
        %p475 = pneg %p81
        %p476 = pneg %p105
        %p477 = pneg %p102
        %p478 = pneg %p126
        %p479 = pneg %p123
        %p480 = pneg %p147
        %p481 = pneg %p144
        %p482 = pneg %p168
        %p483 = pneg %p165
        %p484 = pneg %p189
        %p485 = pneg %p186
        %p486 = pneg %p210
        %p487 = pneg %p207
        %p488 = pneg %p231
        %p489 = pneg %p228
        %p490 = pneg %p252
        %p491 = pneg %p249
        %p492 = pneg %p273
        %p493 = pneg %p270
        %p494 = pneg %p294
        %p495 = pneg %p291
        %p496 = pneg %p320
        %p497 = pneg %p317
        %s498 = sand.u32 %s307, 1
        %s499 = scalar_lea.sflag [#allocation4], %s498
        %s500 = sand.u32 %s307, 1
        %s501 = smul.addr %s500, 16
        %s502 = scalar_lea.vmem [#allocation7], %s501
        %p503 = pneg %p346
        %p504 = pneg %p343
        %s505 = sand.u32 %s333, 1
        %s506 = scalar_lea.sflag [#allocation9], %s505
        %s507 = sand.u32 %s333, 1
        %s508 = smul.addr %s507, 16
        %s509 = scalar_lea.vmem [#allocation8], %s508
        %v510 = vld [vmem:[%s446] sm:$0xff]
        %v511 = vld [vmem:[%s446 + $0x8] sm:$0xff]
        %v512 = vld [vmem:[%s456] sm:$0xff]
        %v513 = vld [vmem:[%s456 + $0x8] sm:$0xff]
        %v514 = vsub.f32 %v510, %v512
        %v515 = vsub.f32 %v511, %v513
        %v516 = vand.u32 2147483647, %v514
        %v517 = vand.u32 2147483647, %v515
        %v518 = vadd.f32 %v516, %v517
        %519 = vadd.xlane.f32.xlu0 %v518
        %v520 = vpop.xlane.xlu0 %519
        %v521 = vmul.f32 %v520, 0.00390625
        %v522 = vmax.f32 %v516, %v517
        %523 = vmax.xlane.f32.xlu0 %v522
        %v524 = vpop.xlane.xlu0 %523
        %v525 = vld [vmem:[%s2] sm:$0xf]
        %v526 = vld [vmem:[%s3] sm:$0xf]
        %v527 = vld [vmem:[%s4] sm:$0xff]
        %v528 = vld [vmem:[%s5] sm:$0xff]
        %v529 = vld [vmem:[%s6] sm:$0xff]
        %v530 = vld [vmem:[%s7] sm:$0xff]
        %v531 = vld [vmem:[%s8] sm:$0xff]
        %v532 = vld [vmem:[%s9] sm:$0xff]
        %v533 = vld [vmem:[%s10] sm:$0xff]
        %v534 = vld [vmem:[%s11] sm:$0xff]
        %v535 = vlaneseq
        %v536 = vand.u32 %v535, 127
        %vm537 = vcmp.eq.s32.totalorder %v536, 0
        %v538 = vsel %vm537, %v521, %v524
        %540 = vset.pattern.permute.xlu0 0
        %541 = vperm.xlu0 %540, %v526
        %v542 = vpop.permute.xlu0 %541
        %vm544 = vcmask 64512
        %v546 = vsel %vm544, %v525, 0
        %548 = vmatpush.msra.mxu0 0.0
        %549 = vmatpush.msra.mxu0 0.0
        %550 = vmatpush.msra.mxu0 0.0
        %551 = vmatpush.msra.mxu0 0.0
        %552 = vmatpush.msra.mxu0 0.0
        %553 = vmatpush.msra.mxu0 0.0
        %554 = vmatpush.msra.mxu0 0.0
        %555 = vmatpush.msra.mxu0 0.0
        %556 = vmatpush.msra.mxu0 0.0
        %557 = vmatpush.msra.mxu0 0.0
        %558 = vmatpush.msra.mxu0 0.0
        %559 = vmatpush.msra.mxu0 0.0
        %560 = vmatpush.msra.mxu0 0.0
        %561 = vmatpush.msra.mxu0 0.0
        %562 = vmatpush.msra.mxu0 0.0
        %563 = vmatpush.msra.mxu0 %v538
        %564 = vmatmul.f32.gmra.mxu0 %v546
        %v565 = vpop.f32.mrf.mxu0
        %v566 = vadd.f32 %v542, %v565
        %567 = vdwg.mxu0
        %v568 = vmax.f32 %v566, 0.0
        %570 = vset.pattern.permute.xlu0 0
        %571 = vperm.xlu0 %570, %v528
        %v572 = vpop.permute.xlu0 %571
        %vm574 = vcmask 31744
        %v576 = vsel %vm574, %v527, 0
        %vm578 = vcmask 1043456
        %v580 = vsel %vm578, %v568, 0
        %582 = vmatpush.msra.mxu0 0.0
        %583 = vmatpush.msra.mxu0 0.0
        %584 = vmatpush.msra.mxu0 0.0
        %585 = vmatpush.msra.mxu0 0.0
        %586 = vmatpush.msra.mxu0 0.0
        %587 = vmatpush.msra.mxu0 0.0
        %588 = vmatpush.msra.mxu0 0.0
        %589 = vmatpush.msra.mxu0 0.0
        %590 = vmatpush.msra.mxu0 0.0
        %591 = vmatpush.msra.mxu0 0.0
        %592 = vmatpush.msra.mxu0 0.0
        %593 = vmatpush.msra.mxu0 0.0
        %594 = vmatpush.msra.mxu0 0.0
        %595 = vmatpush.msra.mxu0 0.0
        %596 = vmatpush.msra.mxu0 0.0
        %597 = vmatpush.msra.mxu0 %v580
        %598 = vmatmul.f32.gmra.mxu0 %v576
        %v599 = vpop.f32.mrf.mxu0
        %v600 = vadd.f32 %v572, %v599
        %601 = vdwg.mxu0
        %603 = vset.pattern.permute.xlu0 0
        %604 = vperm.xlu0 %603, %v529
        %v605 = vpop.permute.xlu0 %604
        %v607 = vmul.f32 %v600, %v605
        %609 = vset.pattern.permute.xlu0 0
        %610 = vperm.xlu0 %609, %v530
        %v611 = vpop.permute.xlu0 %610
        %v613 = vadd.f32 %v607, %v611
        %615 = vset.pattern.permute.xlu0 0
        %616 = vperm.xlu0 %615, %v532
        %v617 = vpop.permute.xlu0 %616
        %v620 = vsel %vm544, %v531, 0
        %622 = vmatpush.msra.mxu0 0.0
        %623 = vmatpush.msra.mxu0 0.0
        %624 = vmatpush.msra.mxu0 0.0
        %625 = vmatpush.msra.mxu0 0.0
        %626 = vmatpush.msra.mxu0 0.0
        %627 = vmatpush.msra.mxu0 0.0
        %628 = vmatpush.msra.mxu0 0.0
        %629 = vmatpush.msra.mxu0 0.0
        %630 = vmatpush.msra.mxu0 0.0
        %631 = vmatpush.msra.mxu0 0.0
        %632 = vmatpush.msra.mxu0 0.0
        %633 = vmatpush.msra.mxu0 0.0
        %634 = vmatpush.msra.mxu0 0.0
        %635 = vmatpush.msra.mxu0 0.0
        %636 = vmatpush.msra.mxu0 0.0
        %637 = vmatpush.msra.mxu0 %v613
        %638 = vmatmul.f32.gmra.mxu0 %v620
        %v639 = vpop.f32.mrf.mxu0
        %v640 = vadd.f32 %v617, %v639
        %641 = vdwg.mxu0
        %v642 = vmul.f32 %v533, %v640
        %v643 = vadd.f32 %v642, 1.0
        %645 = vrot.lane.b32.xlu0 %v640, 127
        %v646 = vpop.permute.xlu0 %645
        %v648 = vmul.f32 %v534, %v646
        %v649 = vadd.f32 %v643, %v648
        %v650 = vmul.f32 %v533, %v646
        %v651 = vadd.f32 %v650, 1.0
        %v652 = vmul.f32 %v534, %v640
        %v653 = vadd.f32 %v651, %v652
        %655 = vset.pattern.permute.xlu0 0
        %656 = vperm.xlu0 %655, %v649
        %v657 = vpop.permute.xlu0 %656
        %v659 = vmul.f32 %v510, %v657
        %v660 = vmul.f32 %v511, %v657
        %661 = vst [vmem:[%s502] sm:$0xff] %v659
        %662 = vst [vmem:[%s502 + $0x8] sm:$0xff] %v660
        %664 = vset.pattern.permute.xlu0 0
        %665 = vperm.xlu0 %664, %v653
        %v666 = vpop.permute.xlu0 %665
        %v668 = vmul.f32 %v512, %v666
        %v669 = vmul.f32 %v513, %v666
        %670 = vst [vmem:[%s509] sm:$0xff] %v668
        %671 = vst [vmem:[%s509 + $0x8] sm:$0xff] %v669
        %s672 = sand.u32 %s307, 1
        %s673 = scalar_lea.sflag [#allocation4], %s672
        %s674 = sand.u32 %s307, 1
        %s675 = smul.addr %s674, 16
        %s676 = scalar_lea.vmem [#allocation7], %s675
        %s677 = sand.u32 %s333, 1
        %s678 = scalar_lea.sflag [#allocation9], %s677
        %s679 = sand.u32 %s333, 1
        %s680 = smul.addr %s679, 16
        %s681 = scalar_lea.vmem [#allocation8], %s680
        // Predicated region
        $region77: #{tpu_custom_call.1} parent=67 // pred_check
          %p682 = pneg %p317
        $region78: #{tpu_custom_call.1} parent=67 // pred_check_branch
          %684 = sbr.rel (%p682) target = $region80
        $region79: #{tpu_custom_call.1} parent=67 // pred_region
          %686 = vsyncadd %s673, 0
          %s687 = smul.addr %s37, 2
          %s688 = smul.addr %s687, 8
          %s689 = scalar_lea.hbm %s12, %s688
          %s691 = sshll.u32 %s676, 4
          %s692 = int_to_ptr.vmem [resolvable:$true] %s691
          %s693 = sshll.u32 %s689, 4
          %s694 = int_to_ptr.hbm [resolvable:$true] %s693
          %696 = dma.vmem_to_hbm [thread:$0]  %s692, 256, %s694, %s673
        $region80: #{tpu_custom_call.1} parent=67 // pred_fallthru
          _
        // Predicated region
        $region81: #{tpu_custom_call.1} parent=67 // pred_check
          %p697 = pneg %p343
        $region82: #{tpu_custom_call.1} parent=67 // pred_check_branch
          %699 = sbr.rel (%p697) target = $region84
        $region83: #{tpu_custom_call.1} parent=67 // pred_region
          %701 = vsyncadd %s678, 0
          %s702 = smul.addr %s37, 2
          %s703 = smul.addr %s702, 8
          %s704 = scalar_lea.hbm %s13, %s703
          %s706 = sshll.u32 %s681, 4
          %s707 = int_to_ptr.vmem [resolvable:$true] %s706
          %s708 = sshll.u32 %s704, 4
          %s709 = int_to_ptr.hbm [resolvable:$true] %s708
          %711 = dma.vmem_to_hbm [thread:$0]  %s707, 256, %s709, %s678
        $region84: #{tpu_custom_call.1} parent=67 // pred_fallthru
          _
      $region68: #{tpu_custom_call.1} parent=5 // pred_fallthru
        _
      %p712 = scmp.le.s32.totalorder 2, %s32
      // Predicated region
      $region85: #{tpu_custom_call.1} parent=5 // pred_check
        %p713 = pneg %p712
      $region86: #{tpu_custom_call.1} parent=5 // pred_check_branch
        %715 = sbr.rel (%p713) target = $region88
      $region87: #{tpu_custom_call.1} parent=5 // pred_region
        %s716 = ssub.s32 %s32, 2
        // Predicated region
        $region89: #{tpu_custom_call.1} parent=87 // pred_check
          %p717 = pneg %p323
        $region90: #{tpu_custom_call.1} parent=87 // pred_check_branch
          %719 = sbr.rel (%p717) target = $region92
        $region91: #{tpu_custom_call.1} parent=87 // pred_region
          %s720 = sand.u32 %s308, 1
          %s721 = scalar_lea.sflag [#allocation4], %s720
          %s722 = sand.u32 %s308, 1
          %s723 = smul.addr %s722, 16
          %s724 = scalar_lea.vmem [#allocation7], %s723
          %726 = dma.done %s721, 256
        $region92: #{tpu_custom_call.1} parent=87 // pred_fallthru
          _
        // Predicated region
        $region93: #{tpu_custom_call.1} parent=87 // pred_check
          %p727 = pneg %p349
        $region94: #{tpu_custom_call.1} parent=87 // pred_check_branch
          %729 = sbr.rel (%p727) target = $region96
        $region95: #{tpu_custom_call.1} parent=87 // pred_region
          %s730 = sand.u32 %s334, 1
          %s731 = scalar_lea.sflag [#allocation9], %s730
          %s732 = sand.u32 %s334, 1
          %s733 = smul.addr %s732, 16
          %s734 = scalar_lea.vmem [#allocation8], %s733
          %736 = dma.done %s731, 256
        $region96: #{tpu_custom_call.1} parent=87 // pred_fallthru
          _
      $region88: #{tpu_custom_call.1} parent=5 // pred_fallthru
        _
    $region6: #{tpu_custom_call.1} parent=1 // loop_footer
      %s36 = sadd.s32 1, %s32
    $region7: #{tpu_custom_call.1} parent=1 // loop_footer_branch
      %31 = sbr.rel target = $region3
    $region8: #{tpu_custom_call.1} parent=1 // loop_exit
      _
    %737 = vsyncpa [#allocation3], 1
    %s738 = scalar_lea.sflag [#allocation3], 1
    %739 = vsyncpa %s738, 1
    %740 = vsyncpa [#allocation6], 1
    %s741 = scalar_lea.sflag [#allocation6], 1
    %742 = vsyncpa %s741, 1
    %743 = vsyncpa [#allocation4], 1
    %s744 = scalar_lea.sflag [#allocation4], 1
    %745 = vsyncpa %s744, 1
    %746 = vsyncpa [#allocation9], 1
    %s747 = scalar_lea.sflag [#allocation9], 1
    %748 = vsyncpa %s747, 1

</llo_original>
